<compile_context>
chip_gen: v5e
topology: v5e:2x2
jax: 0.10.0
libtpu: 0.0.40
codegen_flags: <defaults>
</compile_context>

<pallas_src>
import jax
import jax.numpy as jnp
from jax.experimental import pallas as pl
from jax.experimental.pallas import tpu as pltpu

VOCAB = 64      # vocab_t_size
EMBED = 32      # embed_size
HIDDEN = 32     # hidden_size
VPAD = 128      # lane-dense padded vocab width (multiple of 128)
NEG_BIG = -1e30  # padded-column bias: exp() underflows to 0 -> exact logsumexp


def fused_decoder_kernel(tok_ref,             # (T,) int32 SMEM (used by index_maps only)
                         x_ref,               # (1, 1, E)  embedding row for step t
                         w_ref,               # (E+H, 4H)  fused [W_ih^T ; W_hh^T]
                         bg_ref,              # (1, 4H)    folded gate bias
                         h0_ref, c0_ref,      # (1, H)     initial state
                         wfc_ref, bfc_ref,    # (H, VPAD), (1, VPAD)
                         logp_ref,            # (1, 1, VPAD) per-step output block
                         hout_ref, cout_ref,  # (1, H) VMEM-resident state / final out
                         xh_sc):              # (1, E+H) persistent [x_t, h_{t-1}]
    del tok_ref  # consumed by the BlockSpec index_maps, not by the body
    t = pl.program_id(0)
    E, H = EMBED, HIDDEN

    @pl.when(t == 0)
    def _init():
        xh_sc[:, E:] = h0_ref[...]          # h_{-1}
        cout_ref[...] = c0_ref[...]         # c_{-1} (state lives in the output block)

    # Current embedding row -> lanes [0, E); previous h already sits at [E, E+H).
    xh_sc[:, :E] = x_ref[0]

    # Fused LSTM gate matmul: [x, h] @ [W_ih^T ; W_hh^T] + (b_ih + b_hh) -> (1, 4H)
    gates = (jnp.dot(xh_sc[...], w_ref[...],
                     preferred_element_type=jnp.float32) + bg_ref[...])

    # One full-vreg sigmoid + one tanh (EUP), then slice gate columns [i, f, g, o].
    sig = jax.nn.sigmoid(gates)
    th = jnp.tanh(gates)
    i_g = sig[:, 0 * H:1 * H]
    f_g = sig[:, 1 * H:2 * H]
    g_g = th[:, 2 * H:3 * H]
    o_g = sig[:, 3 * H:4 * H]

    c_new = f_g * cout_ref[...] + i_g * g_g                      # (1, H)
    h_new = o_g * jnp.tanh(c_new)                                # (1, H)

    # Recurrent state stays resident in VMEM across grid steps; the constant
    # output block index means HBM writeback happens exactly once, at grid end.
    cout_ref[...] = c_new
    hout_ref[...] = h_new
    xh_sc[:, E:] = h_new

    # fc + exact log-softmax over the lane-padded vocab (padded cols bias -1e30).
    logits = (jnp.dot(h_new, wfc_ref[...],
                      preferred_element_type=jnp.float32) + bfc_ref[...])
    m = jnp.max(logits, axis=-1, keepdims=True)
    lse = jnp.log(jnp.sum(jnp.exp(logits - m), axis=-1, keepdims=True)) + m
    logp_ref[0] = logits - lse                                   # (1, VPAD), full-lane store


def prepare_decoder_params(emb, w_ih, w_hh, b_ih, b_hh, w_fc, b_fc):
    """One-time weight packing (hoisted out of the per-token path)."""
    w_cat = jnp.concatenate([w_ih.T, w_hh.T], axis=0).astype(jnp.float32)  # (E+H, 4H)
    bg = (b_ih + b_hh).reshape(1, -1).astype(jnp.float32)                  # (1, 4H)
    V, H = w_fc.shape
    wfc_pad = jnp.zeros((H, VPAD), jnp.float32).at[:, :V].set(w_fc.T)      # (H, VPAD)
    bfc_pad = jnp.full((1, VPAD), NEG_BIG, jnp.float32).at[0, :V].set(b_fc)
    emb3 = emb.astype(jnp.float32).reshape(emb.shape[0], 1, emb.shape[1])  # (VOCAB,1,E)
    return dict(emb3=emb3, w_cat=w_cat, bg=bg, wfc_pad=wfc_pad, bfc_pad=bfc_pad)


def decoder_lstm_decode(params, tokens, h0, c0):
    """Fused T-step decode == T sequential forward() calls with the given tokens.

    Returns (log_probs (T, V), h_T (1, H), c_T (1, H)).
    """
    # Clamp for DMA safety (VMEM/HBM gathers have no runtime OOB check);
    # PyTorch would raise on out-of-range ids — inputs are assumed valid.
    tokens = jnp.clip(tokens.astype(jnp.int32), 0, VOCAB - 1)
    T = tokens.shape[0]

    grid_spec = pltpu.PrefetchScalarGridSpec(
        num_scalar_prefetch=1,
        grid=(T,),
        in_specs=[
            # Only the needed embedding row is DMA'd each step (index_map is
            # driven by the scalar-prefetched token ids).
            pl.BlockSpec((1, 1, EMBED), lambda t, tok: (tok[t], 0, 0)),
            # Constant block index -> weights/biases/initial state are DMA'd
            # once and stay VMEM-resident for the whole decode.
            pl.BlockSpec((EMBED + HIDDEN, 4 * HIDDEN), lambda t, tok: (0, 0)),
            pl.BlockSpec((1, 4 * HIDDEN), lambda t, tok: (0, 0)),
            pl.BlockSpec((1, HIDDEN), lambda t, tok: (0, 0)),
            pl.BlockSpec((1, HIDDEN), lambda t, tok: (0, 0)),
            pl.BlockSpec((HIDDEN, VPAD), lambda t, tok: (0, 0)),
            pl.BlockSpec((1, VPAD), lambda t, tok: (0, 0)),
        ],
        out_specs=[
            pl.BlockSpec((1, 1, VPAD), lambda t, tok: (t, 0, 0)),   # per-step log-probs
            pl.BlockSpec((1, HIDDEN), lambda t, tok: (0, 0)),       # resident h state
            pl.BlockSpec((1, HIDDEN), lambda t, tok: (0, 0)),       # resident c state
        ],
        scratch_shapes=[pltpu.VMEM((1, EMBED + HIDDEN), jnp.float32)],
    )

    out_shapes = (
        jax.ShapeDtypeStruct((T, 1, VPAD), jnp.float32),
        jax.ShapeDtypeStruct((1, HIDDEN), jnp.float32),
        jax.ShapeDtypeStruct((1, HIDDEN), jnp.float32),
    )

    logp_pad, h_T, c_T = pl.pallas_call(
        fused_decoder_kernel,
        out_shape=out_shapes,
        grid_spec=grid_spec,
        compiler_params=pltpu.CompilerParams(
            dimension_semantics=("arbitrary",)),   # sequential recurrence
    )(tokens, params["emb3"], params["w_cat"], params["bg"], h0, c0,
      params["wfc_pad"], params["bfc_pad"])

    return logp_pad[:, 0, :VOCAB], h_T, c_T


def decoder_lstm_step(params, tok, h, c):
    """One forward() call of the module: tok is shape (1,) int32."""
    logp, h1, c1 = decoder_lstm_decode(params, jnp.reshape(tok, (1,)), h, c)
    return logp, h1, c1


def _reference_decode(tokens, emb, w_ih, w_hh, b_ih, b_hh, h0, c0, w_fc, b_fc):
    H = HIDDEN

    def step(carry, tok):
        h, c = carry
        x = emb[tok][None, :]
        gates = x @ w_ih.T + h @ w_hh.T + (b_ih + b_hh)[None, :]
        i = jax.nn.sigmoid(gates[:, :H])
        f = jax.nn.sigmoid(gates[:, H:2 * H])
        g = jnp.tanh(gates[:, 2 * H:3 * H])
        o = jax.nn.sigmoid(gates[:, 3 * H:])
        c = f * c + i * g
        h = o * jnp.tanh(c)
        logits = h @ w_fc.T + b_fc[None, :]
        return (h, c), jax.nn.log_softmax(logits, axis=1)[0]

    (h, c), logps = jax.lax.scan(step, (h0, c0), tokens)
    return logps, h, c


if __name__ == "__main__":
    key = jax.random.PRNGKey(0)
    ks = jax.random.split(key, 8)
    s = 1.0 / float(jnp.sqrt(HIDDEN))

    # Deterministic synthetic parameters (PyTorch-style uniform(-1/sqrt(H), 1/sqrt(H))).
    emb = jax.random.normal(ks[0], (VOCAB, EMBED), jnp.float32)
    w_ih = jax.random.uniform(ks[1], (4 * HIDDEN, EMBED), jnp.float32, -s, s)
    w_hh = jax.random.uniform(ks[2], (4 * HIDDEN, HIDDEN), jnp.float32, -s, s)
    b_ih = jax.random.uniform(ks[3], (4 * HIDDEN,), jnp.float32, -s, s)
    b_hh = jax.random.uniform(ks[4], (4 * HIDDEN,), jnp.float32, -s, s)
    w_fc = jax.random.uniform(ks[5], (VOCAB, HIDDEN), jnp.float32, -s, s)
    b_fc = jax.random.uniform(ks[6], (VOCAB,), jnp.float32, -s, s)

    T = 8
    tokens = jax.random.randint(ks[7], (T,), 0, VOCAB, dtype=jnp.int32)
    h0 = jnp.zeros((1, HIDDEN), jnp.float32)   # initHidden()
    c0 = jnp.zeros((1, HIDDEN), jnp.float32)

    params = prepare_decoder_params(emb, w_ih, w_hh, b_ih, b_hh, w_fc, b_fc)

    ref_logps, ref_h, ref_c = _reference_decode(tokens, emb, w_ih, w_hh,
                                                b_ih, b_hh, h0, c0, w_fc, b_fc)

    # Fused T-step decode (== T sequential forward() calls).
    logps, h_T, c_T = decoder_lstm_decode(params, tokens, h0, c0)
    jax.block_until_ready((logps, h_T, c_T))

    assert logps.shape == (T, VOCAB)
    assert jnp.allclose(logps, ref_logps, atol=1e-4, rtol=1e-4)
    assert jnp.allclose(h_T, ref_h, atol=1e-4, rtol=1e-4)
    assert jnp.allclose(c_T, ref_c, atol=1e-4, rtol=1e-4)

    # Single-step forward (the module's exact per-call semantics).
    logp1, h1, c1 = decoder_lstm_step(params, tokens[:1], h0, c0)
    jax.block_until_ready((logp1, h1, c1))
    assert jnp.allclose(logp1, ref_logps[:1], atol=1e-4, rtol=1e-4)

    print("KERNEL_OK")
</pallas_src>

<mosaic_0001>
module attributes {stable_mosaic.version = 11 : i64} {
  func.func @fused_decoder_kernel(%arg0: i32, %arg1: memref<8xi32, #tpu.memory_space<smem>>, %arg2: memref<1x1x32xf32, #tpu.memory_space<vmem>>, %arg3: memref<64x128xf32, #tpu.memory_space<vmem>>, %arg4: memref<1x128xf32, #tpu.memory_space<vmem>>, %arg5: memref<1x32xf32, #tpu.memory_space<vmem>>, %arg6: memref<1x32xf32, #tpu.memory_space<vmem>>, %arg7: memref<32x128xf32, #tpu.memory_space<vmem>>, %arg8: memref<1x128xf32, #tpu.memory_space<vmem>>, %arg9: memref<1x1x128xf32, #tpu.memory_space<vmem>>, %arg10: memref<1x32xf32, #tpu.memory_space<vmem>>, %arg11: memref<1x32xf32, #tpu.memory_space<vmem>>, %arg12: memref<1x64xf32, #tpu.memory_space<vmem>>) attributes {dimension_semantics = [#tpu.dimension_semantics<arbitrary>], iteration_bounds = array<i64: 8>, scalar_prefetch = 1 : i64, scratch_operands = 1 : i64, tpu.core_type = #tpu.core_type<tc>, window_params = [{transform_indices = @transform_0, window_bounds = array<i64: 1, 1, 32>}, {pipeline_mode = #tpu.pipeline_mode<synchronous>, transform_indices = @transform_1, window_bounds = array<i64: 64, 128>}, {pipeline_mode = #tpu.pipeline_mode<synchronous>, transform_indices = @transform_2, window_bounds = array<i64: 1, 128>}, {pipeline_mode = #tpu.pipeline_mode<synchronous>, transform_indices = @transform_3, window_bounds = array<i64: 1, 32>}, {pipeline_mode = #tpu.pipeline_mode<synchronous>, transform_indices = @transform_4, window_bounds = array<i64: 1, 32>}, {pipeline_mode = #tpu.pipeline_mode<synchronous>, transform_indices = @transform_5, window_bounds = array<i64: 32, 128>}, {pipeline_mode = #tpu.pipeline_mode<synchronous>, transform_indices = @transform_6, window_bounds = array<i64: 1, 128>}, {transform_indices = @transform_7, window_bounds = array<i64: 1, 1, 128>}, {pipeline_mode = #tpu.pipeline_mode<synchronous>, transform_indices = @transform_8, window_bounds = array<i64: 1, 32>}, {pipeline_mode = #tpu.pipeline_mode<synchronous>, transform_indices = @transform_9, window_bounds = array<i64: 1, 32>}]} {
    %c0_i32 = arith.constant 0 : i32
    %0 = arith.cmpi eq, %arg0, %c0_i32 : i32
    %1 = arith.extui %0 : i1 to i32
    %c0_i32_0 = arith.constant 0 : i32
    %2 = arith.cmpi ne, %1, %c0_i32_0 : i32
    scf.if %2 {
      %c0_29 = arith.constant 0 : index
      %c0_30 = arith.constant 0 : index
      %48 = vector.load %arg5[%c0_29, %c0_30] : memref<1x32xf32, #tpu.memory_space<vmem>>, vector<1x32xf32>
      %c0_31 = arith.constant 0 : index
      %c32_32 = arith.constant 32 : index
      %49 = vector.load %arg12[%c0_31, %c32_32] : memref<1x64xf32, #tpu.memory_space<vmem>>, vector<1x32xf32>
      tpu.vector_store %arg12[%c0_31, %c32_32], %48 {strides = array<i32>} : memref<1x64xf32, #tpu.memory_space<vmem>>, vector<1x32xf32>,
      %c0_33 = arith.constant 0 : index
      %c0_34 = arith.constant 0 : index
      %50 = vector.load %arg6[%c0_33, %c0_34] : memref<1x32xf32, #tpu.memory_space<vmem>>, vector<1x32xf32>
      %c0_35 = arith.constant 0 : index
      %c0_36 = arith.constant 0 : index
      %51 = vector.load %arg11[%c0_35, %c0_36] : memref<1x32xf32, #tpu.memory_space<vmem>>, vector<1x32xf32>
      tpu.vector_store %arg11[%c0_35, %c0_36], %50 {strides = array<i32>} : memref<1x32xf32, #tpu.memory_space<vmem>>, vector<1x32xf32>,
    } else {
    }
    %c0 = arith.constant 0 : index
    %c0_1 = arith.constant 0 : index
    %c0_2 = arith.constant 0 : index
    %3 = vector.load %arg2[%c0, %c0_1, %c0_2] : memref<1x1x32xf32, #tpu.memory_space<vmem>>, vector<1x1x32xf32>
    %4 = vector.shape_cast %3 : vector<1x1x32xf32> to vector<1x32xf32>
    %c0_3 = arith.constant 0 : index
    %c0_4 = arith.constant 0 : index
    %5 = vector.load %arg12[%c0_3, %c0_4] : memref<1x64xf32, #tpu.memory_space<vmem>>, vector<1x32xf32>
    tpu.vector_store %arg12[%c0_3, %c0_4], %4 {strides = array<i32>} : memref<1x64xf32, #tpu.memory_space<vmem>>, vector<1x32xf32>,
    %c0_5 = arith.constant 0 : index
    %c0_6 = arith.constant 0 : index
    %6 = vector.load %arg12[%c0_5, %c0_6] : memref<1x64xf32, #tpu.memory_space<vmem>>, vector<1x64xf32>
    %c0_7 = arith.constant 0 : index
    %c0_8 = arith.constant 0 : index
    %7 = vector.load %arg3[%c0_7, %c0_8] : memref<64x128xf32, #tpu.memory_space<vmem>>, vector<64x128xf32>
    %cst = arith.constant dense<0.000000e+00> : vector<1x128xf32>
    %8 = tpu.matmul %6, %7, %cst {dimension_numbers = #tpu.dot_dimension_numbers<[1], [0], [0], [1], [0, 0, 1, 1], [], []>} : vector<1x64xf32>, vector<64x128xf32>, vector<1x128xf32> -> vector<1x128xf32>
    %c0_9 = arith.constant 0 : index
    %c0_10 = arith.constant 0 : index
    %9 = vector.load %arg4[%c0_9, %c0_10] : memref<1x128xf32, #tpu.memory_space<vmem>>, vector<1x128xf32>
    %10 = arith.addf %8, %9 : vector<1x128xf32>
    %11 = arith.negf %10 : vector<1x128xf32>
    %12 = math.exp %11 : vector<1x128xf32>
    %cst_11 = arith.constant 1.000000e+00 : f32
    %13 = vector.broadcast %cst_11 : f32 to vector<1x128xf32>
    %14 = arith.addf %13, %12 : vector<1x128xf32>
    %15 = arith.divf %13, %14 : vector<1x128xf32>
    %16 = math.tanh %10 : vector<1x128xf32>
    %17 = vector.extract_strided_slice %15 {offsets = [0, 0], sizes = [1, 32], strides = [1, 1]} : vector<1x128xf32> to vector<1x32xf32>
    %18 = vector.extract_strided_slice %15 {offsets = [0, 32], sizes = [1, 32], strides = [1, 1]} : vector<1x128xf32> to vector<1x32xf32>
    %19 = vector.extract_strided_slice %16 {offsets = [0, 64], sizes = [1, 32], strides = [1, 1]} : vector<1x128xf32> to vector<1x32xf32>
    %20 = vector.extract_strided_slice %15 {offsets = [0, 96], sizes = [1, 32], strides = [1, 1]} : vector<1x128xf32> to vector<1x32xf32>
    %c0_12 = arith.constant 0 : index
    %c0_13 = arith.constant 0 : index
    %21 = vector.load %arg11[%c0_12, %c0_13] : memref<1x32xf32, #tpu.memory_space<vmem>>, vector<1x32xf32>
    %22 = arith.mulf %18, %21 : vector<1x32xf32>
    %23 = arith.mulf %17, %19 : vector<1x32xf32>
    %24 = arith.addf %22, %23 : vector<1x32xf32>
    %25 = math.tanh %24 : vector<1x32xf32>
    %26 = arith.mulf %20, %25 : vector<1x32xf32>
    %c0_14 = arith.constant 0 : index
    %c0_15 = arith.constant 0 : index
    %27 = vector.load %arg11[%c0_14, %c0_15] : memref<1x32xf32, #tpu.memory_space<vmem>>, vector<1x32xf32>
    tpu.vector_store %arg11[%c0_14, %c0_15], %24 {strides = array<i32>} : memref<1x32xf32, #tpu.memory_space<vmem>>, vector<1x32xf32>,
    %c0_16 = arith.constant 0 : index
    %c0_17 = arith.constant 0 : index
    %28 = vector.load %arg10[%c0_16, %c0_17] : memref<1x32xf32, #tpu.memory_space<vmem>>, vector<1x32xf32>
    tpu.vector_store %arg10[%c0_16, %c0_17], %26 {strides = array<i32>} : memref<1x32xf32, #tpu.memory_space<vmem>>, vector<1x32xf32>,
    %c0_18 = arith.constant 0 : index
    %c32 = arith.constant 32 : index
    %29 = vector.load %arg12[%c0_18, %c32] : memref<1x64xf32, #tpu.memory_space<vmem>>, vector<1x32xf32>
    tpu.vector_store %arg12[%c0_18, %c32], %26 {strides = array<i32>} : memref<1x64xf32, #tpu.memory_space<vmem>>, vector<1x32xf32>,
    %c0_19 = arith.constant 0 : index
    %c0_20 = arith.constant 0 : index
    %30 = vector.load %arg7[%c0_19, %c0_20] : memref<32x128xf32, #tpu.memory_space<vmem>>, vector<32x128xf32>
    %cst_21 = arith.constant dense<0.000000e+00> : vector<1x128xf32>
    %31 = tpu.matmul %26, %30, %cst_21 {dimension_numbers = #tpu.dot_dimension_numbers<[1], [0], [0], [1], [0, 0, 1, 1], [], []>} : vector<1x32xf32>, vector<32x128xf32>, vector<1x128xf32> -> vector<1x128xf32>
    %c0_22 = arith.constant 0 : index
    %c0_23 = arith.constant 0 : index
    %32 = vector.load %arg8[%c0_22, %c0_23] : memref<1x128xf32, #tpu.memory_space<vmem>>, vector<1x128xf32>
    %33 = arith.addf %31, %32 : vector<1x128xf32>
    %cst_24 = arith.constant dense<0xFF800000> : vector<1xf32>
    %34 = vector.multi_reduction <maximumf>, %33, %cst_24 [1] : vector<1x128xf32> to vector<1xf32>
    %35 = vector.shape_cast %34 : vector<1xf32> to vector<1x1xf32>
    %36 = vector.broadcast %35 : vector<1x1xf32> to vector<1x128xf32>
    %37 = arith.subf %33, %36 : vector<1x128xf32>
    %38 = math.exp %37 : vector<1x128xf32>
    %cst_25 = arith.constant dense<0.000000e+00> : vector<1xf32>
    %39 = vector.multi_reduction <add>, %38, %cst_25 [1] : vector<1x128xf32> to vector<1xf32>
    %40 = vector.shape_cast %39 : vector<1xf32> to vector<1x1xf32>
    %41 = math.log %40 : vector<1x1xf32>
    %42 = arith.addf %41, %35 : vector<1x1xf32>
    %43 = vector.broadcast %42 : vector<1x1xf32> to vector<1x128xf32>
    %44 = arith.subf %33, %43 : vector<1x128xf32>
    %c0_26 = arith.constant 0 : index
    %c0_27 = arith.constant 0 : index
    %c0_28 = arith.constant 0 : index
    %45 = vector.load %arg9[%c0_26, %c0_27, %c0_28] : memref<1x1x128xf32, #tpu.memory_space<vmem>>, vector<1x1x128xf32>
    %46 = vector.shape_cast %45 : vector<1x1x128xf32> to vector<1x128xf32>
    %47 = vector.shape_cast %44 : vector<1x128xf32> to vector<1x1x128xf32>
    tpu.vector_store %arg9[%c0_26, %c0_27, %c0_28], %47 {strides = array<i32>} : memref<1x1x128xf32, #tpu.memory_space<vmem>>, vector<1x1x128xf32>,
    return
  }
  func.func @transform_0(%arg0: i32, %arg1: memref<8xi32, #tpu.memory_space<smem>>) -> (i32, i32, i32) {
    %0 = arith.index_cast %arg0 : i32 to index
    %1 = memref.load %arg1[%0] : memref<8xi32, #tpu.memory_space<smem>>
    %c0_i32 = arith.constant 0 : i32
    %c0_i32_0 = arith.constant 0 : i32
    %c0_i32_1 = arith.constant 0 : i32
    return %1, %c0_i32, %c0_i32_0 : i32, i32, i32
  }
  func.func @transform_1(%arg0: i32, %arg1: memref<8xi32, #tpu.memory_space<smem>>) -> (i32, i32) {
    %c0_i32 = arith.constant 0 : i32
    %c0_i32_0 = arith.constant 0 : i32
    %c0_i32_1 = arith.constant 0 : i32
    return %c0_i32, %c0_i32_0 : i32, i32
  }
  func.func @transform_2(%arg0: i32, %arg1: memref<8xi32, #tpu.memory_space<smem>>) -> (i32, i32) {
    %c0_i32 = arith.constant 0 : i32
    %c0_i32_0 = arith.constant 0 : i32
    %c0_i32_1 = arith.constant 0 : i32
    return %c0_i32, %c0_i32_0 : i32, i32
  }
  func.func @transform_3(%arg0: i32, %arg1: memref<8xi32, #tpu.memory_space<smem>>) -> (i32, i32) {
    %c0_i32 = arith.constant 0 : i32
    %c0_i32_0 = arith.constant 0 : i32
    %c0_i32_1 = arith.constant 0 : i32
    return %c0_i32, %c0_i32_0 : i32, i32
  }
  func.func @transform_4(%arg0: i32, %arg1: memref<8xi32, #tpu.memory_space<smem>>) -> (i32, i32) {
    %c0_i32 = arith.constant 0 : i32
    %c0_i32_0 = arith.constant 0 : i32
    %c0_i32_1 = arith.constant 0 : i32
    return %c0_i32, %c0_i32_0 : i32, i32
  }
  func.func @transform_5(%arg0: i32, %arg1: memref<8xi32, #tpu.memory_space<smem>>) -> (i32, i32) {
    %c0_i32 = arith.constant 0 : i32
    %c0_i32_0 = arith.constant 0 : i32
    %c0_i32_1 = arith.constant 0 : i32
    return %c0_i32, %c0_i32_0 : i32, i32
  }
  func.func @transform_6(%arg0: i32, %arg1: memref<8xi32, #tpu.memory_space<smem>>) -> (i32, i32) {
    %c0_i32 = arith.constant 0 : i32
    %c0_i32_0 = arith.constant 0 : i32
    %c0_i32_1 = arith.constant 0 : i32
    return %c0_i32, %c0_i32_0 : i32, i32
  }
  func.func @transform_7(%arg0: i32, %arg1: memref<8xi32, #tpu.memory_space<smem>>) -> (i32, i32, i32) {
    %c0_i32 = arith.constant 0 : i32
    %c0_i32_0 = arith.constant 0 : i32
    %c0_i32_1 = arith.constant 0 : i32
    return %arg0, %c0_i32, %c0_i32_0 : i32, i32, i32
  }
  func.func @transform_8(%arg0: i32, %arg1: memref<8xi32, #tpu.memory_space<smem>>) -> (i32, i32) {
    %c0_i32 = arith.constant 0 : i32
    %c0_i32_0 = arith.constant 0 : i32
    %c0_i32_1 = arith.constant 0 : i32
    return %c0_i32, %c0_i32_0 : i32, i32
  }
  func.func @transform_9(%arg0: i32, %arg1: memref<8xi32, #tpu.memory_space<smem>>) -> (i32, i32) {
    %c0_i32 = arith.constant 0 : i32
    %c0_i32_0 = arith.constant 0 : i32
    %c0_i32_1 = arith.constant 0 : i32
    return %c0_i32, %c0_i32_0 : i32, i32
  }
}

</mosaic_0001>

<llo_original>
// kernel: tpu_custom_call.1
$region0: #{tpu_custom_call.1}
  #allocation0 [shape = 'u32[]', space=smem, size = 0x4, offset = 0x4, fixed_abs, tag = 'smem constant byte address 0x4 - core index']
  #allocation1 [shape = 'u32[72,128]{1,0:T(1,128)}', space=vmem, size = 0x9000, scoped, tag = 'internal scratch']
  #allocation2 [shape = 'f32[1,64]{1,0:T(1,128)}', space=vmem, size = 0x200, scoped, tag = 'scratch operand']
  #allocation3 [shape = 's32[1]{0}', space=sflag, size = 0x4, scoped, tag = 'scoped memory for tpu_custom_call.1']
  #allocation4 [shape = 'u8[512]{0}', space=smem, size = 0x200, scoped, tag = 'prefetched SMEM operand 0']
  %s0 = inlined_call_operand.vmem [shape: s32[8], index: 0, kind: input, shape index: {}]
  %s1 = inlined_call_operand.vmem [shape: f32[64,1,32], index: 1, kind: input, shape index: {}]
  %s2 = inlined_call_operand.vmem [shape: f32[64,128], index: 2, kind: input, shape index: {}]
  %s3 = inlined_call_operand.hbm [shape: f32[1,128], index: 3, kind: input, shape index: {}]
  %s4 = inlined_call_operand.vmem [shape: f32[1,32], index: 4, kind: input, shape index: {}]
  %s5 = inlined_call_operand.vmem [shape: f32[1,32], index: 5, kind: input, shape index: {}]
  %s6 = inlined_call_operand.vmem [shape: f32[32,128], index: 6, kind: input, shape index: {}]
  %s7 = inlined_call_operand.vmem [shape: f32[1,128], index: 7, kind: input, shape index: {}]
  %s8 = inlined_call_operand.hbm [shape: f32[8,1,128], index: 8, kind: output, shape index: {0}]
  %s9 = inlined_call_operand.hbm [shape: f32[1,32], index: 9, kind: output, shape index: {1}]
  %s10 = inlined_call_operand.hbm [shape: f32[1,32], index: 10, kind: output, shape index: {2}]
  %11 = xla_tuple %s8, %s9, %s10
  %s12 = sld [smem:[#allocation0]]
  $region85: #{tpu_custom_call.1} parent=0
    _
  %s14 = ssub.s32 1, %s12
  %s15 = scalar_select 0, %s14, %s12
  %s17 = sshll.u32 %s0, 4
  %s18 = int_to_ptr.vmem [resolvable:$true] %s17
  %20 = dma.vmem_to_smem %s18, 16, [#allocation4], [#allocation3]
  %22 = dma.done [#allocation3], 16
  %23 = sfence
  $region1: #{tpu_custom_call.1} parent=0
    #allocation5 [shape = 'u8[512]{0}', space=vmem, size = 0x400, scoped, tag = 'input window, operand 3, single buffered']
    #allocation6 [shape = 's32[2]{0}', space=sflag, size = 0x8, scoped, tag = 'scoped memory for tpu_custom_call.1']
    #allocation7 [shape = 's32[2]{0}', space=sflag, size = 0x8, scoped, tag = 'scoped memory for tpu_custom_call.1']
    #allocation8 [shape = 'u8[1024]{0}', space=vmem, size = 0x400, scoped, tag = 'output window, operand 0']
    #allocation9 [shape = 'u8[512]{0}', space=vmem, size = 0x400, scoped, tag = 'output window, operand 1, single buffered']
    #allocation10 [shape = 's32[1]{0}', space=sflag, size = 0x4, scoped, tag = 'scoped memory for tpu_custom_call.1']
    #allocation11 [shape = 'u8[512]{0}', space=vmem, size = 0x400, scoped, tag = 'output window, operand 2, single buffered']
    %24 = vsyncpa [#allocation6], 0
    %25 = vsyncpa [#allocation7], 0
    %s26 = scalar_lea.sflag [#allocation7], 1
    %27 = vsyncpa %s26, 0
    %28 = vsyncpa [#allocation10], 0
    loop: start=0, step=1, limit=10
    $region2: #{tpu_custom_call.1} parent=1 // loop_pre_header
      _
    $region3: #{tpu_custom_call.1} parent=1 // loop_header
      %s30 = sphi 0, %s34
      %p31 = scmp.ge.s32.totalorder %s30, 10
      %s42 = sphi 0, %s44
      %s45 = sphi 0, %s42
      %s46 = sphi 0, %s45
      %s62 = sphi 0, %s46
      %s66 = sphi 0, %s66
      %s68 = sphi 0, %s66
      %s69 = sphi 0, %s68
      %s83 = sphi 0, %s69
      %s87 = sphi 0, %s87
      %s89 = sphi 0, %s87
      %s90 = sphi 0, %s89
      %s104 = sphi 0, %s90
      %s108 = sphi 0, %s108
      %s110 = sphi 0, %s108
      %s111 = sphi 0, %s110
      %s125 = sphi 0, %s111
      %s129 = sphi 0, %s129
      %s131 = sphi 0, %s129
      %s132 = sphi 0, %s131
      %s146 = sphi 0, %s132
      %s150 = sphi 0, %s150
      %s152 = sphi 0, %s150
      %s153 = sphi 0, %s152
      %s167 = sphi 0, %s153
      %s171 = sphi 0, %s171
      %s173 = sphi 0, %s171
      %s174 = sphi 0, %s173
      %s188 = sphi 0, %s174
      %s194 = sphi 0, %s196
      %s197 = sphi 0, %s194
      %s198 = sphi 0, %s197
      %s214 = sphi 0, %s198
      %s218 = sphi 0, %s218
      %s220 = sphi 0, %s218
      %s221 = sphi 0, %s220
      %s235 = sphi 0, %s221
      %s239 = sphi 0, %s239
      %s241 = sphi 0, %s239
      %s242 = sphi 0, %s241
      %s256 = sphi 0, %s242
    $region4: #{tpu_custom_call.1} parent=1 // loop_header_branch
      %33 = sbr.rel (%p31) target = $region8
    $region5: #{tpu_custom_call.1} parent=1 // loop_body
      %s35 = ssub.s32 %s30, 1
      %s36 = ssub.s32 %s30, 2
      %s37 = sadd.s32 %s30, 1
      %s38 = sld [smem:[#allocation4 + %s30]]
      %s39 = sld [smem:[#allocation4 + %s37]]
      %s40 = ssub.s32 %s38, %s39
      %p41 = scmp.eq.s32.totalorder %s40, 0
      %s43 = sadd.s32 %s42, 1
      %s44 = scalar_select %p41, %s42, %s43
      %p47 = pneg %p41
      %p48 = scmp.eq.s32.totalorder %s30, 7
      %p49 = por %p47, %p48
      %p50 = scmp.ne.s32.totalorder %s42, %s45
      %p51 = scmp.eq.s32.totalorder %s30, 0
      %p52 = por %p50, %p51
      %p53 = scmp.ne.s32.totalorder %s42, %s45
      %p54 = scmp.eq.s32.totalorder %s35, 7
      %p55 = por %p53, %p54
      %p56 = scmp.ne.s32.totalorder %s45, %s46
      %p57 = scmp.eq.s32.totalorder %s35, 0
      %p58 = por %p56, %p57
      %p59 = scmp.ne.s32.totalorder %s45, %s46
      %p60 = scmp.eq.s32.totalorder %s36, 7
      %p61 = por %p59, %p60
      %p63 = scmp.ne.s32.totalorder %s46, %s62
      %p64 = scmp.eq.s32.totalorder %s36, 0
      %p65 = por %p63, %p64
      %s67 = sadd.s32 %s66, 1
      %p70 = scmp.eq.s32.totalorder %s30, 7
      %p71 = scmp.ne.s32.totalorder %s66, %s68
      %p72 = scmp.eq.s32.totalorder %s30, 0
      %p73 = por %p71, %p72
      %p74 = scmp.ne.s32.totalorder %s66, %s68
      %p75 = scmp.eq.s32.totalorder %s35, 7
      %p76 = por %p74, %p75
      %p77 = scmp.ne.s32.totalorder %s68, %s69
      %p78 = scmp.eq.s32.totalorder %s35, 0
      %p79 = por %p77, %p78
      %p80 = scmp.ne.s32.totalorder %s68, %s69
      %p81 = scmp.eq.s32.totalorder %s36, 7
      %p82 = por %p80, %p81
      %p84 = scmp.ne.s32.totalorder %s69, %s83
      %p85 = scmp.eq.s32.totalorder %s36, 0
      %p86 = por %p84, %p85
      %s88 = sadd.s32 %s87, 1
      %p91 = scmp.eq.s32.totalorder %s30, 7
      %p92 = scmp.ne.s32.totalorder %s87, %s89
      %p93 = scmp.eq.s32.totalorder %s30, 0
      %p94 = por %p92, %p93
      %p95 = scmp.ne.s32.totalorder %s87, %s89
      %p96 = scmp.eq.s32.totalorder %s35, 7
      %p97 = por %p95, %p96
      %p98 = scmp.ne.s32.totalorder %s89, %s90
      %p99 = scmp.eq.s32.totalorder %s35, 0
      %p100 = por %p98, %p99
      %p101 = scmp.ne.s32.totalorder %s89, %s90
      %p102 = scmp.eq.s32.totalorder %s36, 7
      %p103 = por %p101, %p102
      %p105 = scmp.ne.s32.totalorder %s90, %s104
      %p106 = scmp.eq.s32.totalorder %s36, 0
      %p107 = por %p105, %p106
      %s109 = sadd.s32 %s108, 1
      %p112 = scmp.eq.s32.totalorder %s30, 7
      %p113 = scmp.ne.s32.totalorder %s108, %s110
      %p114 = scmp.eq.s32.totalorder %s30, 0
      %p115 = por %p113, %p114
      %p116 = scmp.ne.s32.totalorder %s108, %s110
      %p117 = scmp.eq.s32.totalorder %s35, 7
      %p118 = por %p116, %p117
      %p119 = scmp.ne.s32.totalorder %s110, %s111
      %p120 = scmp.eq.s32.totalorder %s35, 0
      %p121 = por %p119, %p120
      %p122 = scmp.ne.s32.totalorder %s110, %s111
      %p123 = scmp.eq.s32.totalorder %s36, 7
      %p124 = por %p122, %p123
      %p126 = scmp.ne.s32.totalorder %s111, %s125
      %p127 = scmp.eq.s32.totalorder %s36, 0
      %p128 = por %p126, %p127
      %s130 = sadd.s32 %s129, 1
      %p133 = scmp.eq.s32.totalorder %s30, 7
      %p134 = scmp.ne.s32.totalorder %s129, %s131
      %p135 = scmp.eq.s32.totalorder %s30, 0
      %p136 = por %p134, %p135
      %p137 = scmp.ne.s32.totalorder %s129, %s131
      %p138 = scmp.eq.s32.totalorder %s35, 7
      %p139 = por %p137, %p138
      %p140 = scmp.ne.s32.totalorder %s131, %s132
      %p141 = scmp.eq.s32.totalorder %s35, 0
      %p142 = por %p140, %p141
      %p143 = scmp.ne.s32.totalorder %s131, %s132
      %p144 = scmp.eq.s32.totalorder %s36, 7
      %p145 = por %p143, %p144
      %p147 = scmp.ne.s32.totalorder %s132, %s146
      %p148 = scmp.eq.s32.totalorder %s36, 0
      %p149 = por %p147, %p148
      %s151 = sadd.s32 %s150, 1
      %p154 = scmp.eq.s32.totalorder %s30, 7
      %p155 = scmp.ne.s32.totalorder %s150, %s152
      %p156 = scmp.eq.s32.totalorder %s30, 0
      %p157 = por %p155, %p156
      %p158 = scmp.ne.s32.totalorder %s150, %s152
      %p159 = scmp.eq.s32.totalorder %s35, 7
      %p160 = por %p158, %p159
      %p161 = scmp.ne.s32.totalorder %s152, %s153
      %p162 = scmp.eq.s32.totalorder %s35, 0
      %p163 = por %p161, %p162
      %p164 = scmp.ne.s32.totalorder %s152, %s153
      %p165 = scmp.eq.s32.totalorder %s36, 7
      %p166 = por %p164, %p165
      %p168 = scmp.ne.s32.totalorder %s153, %s167
      %p169 = scmp.eq.s32.totalorder %s36, 0
      %p170 = por %p168, %p169
      %s172 = sadd.s32 %s171, 1
      %p175 = scmp.eq.s32.totalorder %s30, 7
      %p176 = scmp.ne.s32.totalorder %s171, %s173
      %p177 = scmp.eq.s32.totalorder %s30, 0
      %p178 = por %p176, %p177
      %p179 = scmp.ne.s32.totalorder %s171, %s173
      %p180 = scmp.eq.s32.totalorder %s35, 7
      %p181 = por %p179, %p180
      %p182 = scmp.ne.s32.totalorder %s173, %s174
      %p183 = scmp.eq.s32.totalorder %s35, 0
      %p184 = por %p182, %p183
      %p185 = scmp.ne.s32.totalorder %s173, %s174
      %p186 = scmp.eq.s32.totalorder %s36, 7
      %p187 = por %p185, %p186
      %p189 = scmp.ne.s32.totalorder %s174, %s188
      %p190 = scmp.eq.s32.totalorder %s36, 0
      %p191 = por %p189, %p190
      %s192 = ssub.s32 %s30, %s37
      %p193 = scmp.eq.s32.totalorder %s192, 0
      %s195 = sadd.s32 %s194, 1
      %s196 = scalar_select %p193, %s194, %s195
      %p199 = pneg %p193
      %p200 = scmp.eq.s32.totalorder %s30, 7
      %p201 = por %p199, %p200
      %p202 = scmp.ne.s32.totalorder %s194, %s197
      %p203 = scmp.eq.s32.totalorder %s30, 0
      %p204 = por %p202, %p203
      %p205 = scmp.ne.s32.totalorder %s194, %s197
      %p206 = scmp.eq.s32.totalorder %s35, 7
      %p207 = por %p205, %p206
      %p208 = scmp.ne.s32.totalorder %s197, %s198
      %p209 = scmp.eq.s32.totalorder %s35, 0
      %p210 = por %p208, %p209
      %p211 = scmp.ne.s32.totalorder %s197, %s198
      %p212 = scmp.eq.s32.totalorder %s36, 7
      %p213 = por %p211, %p212
      %p215 = scmp.ne.s32.totalorder %s198, %s214
      %p216 = scmp.eq.s32.totalorder %s36, 0
      %p217 = por %p215, %p216
      %s219 = sadd.s32 %s218, 1
      %p222 = scmp.eq.s32.totalorder %s30, 7
      %p223 = scmp.ne.s32.totalorder %s218, %s220
      %p224 = scmp.eq.s32.totalorder %s30, 0
      %p225 = por %p223, %p224
      %p226 = scmp.ne.s32.totalorder %s218, %s220
      %p227 = scmp.eq.s32.totalorder %s35, 7
      %p228 = por %p226, %p227
      %p229 = scmp.ne.s32.totalorder %s220, %s221
      %p230 = scmp.eq.s32.totalorder %s35, 0
      %p231 = por %p229, %p230
      %p232 = scmp.ne.s32.totalorder %s220, %s221
      %p233 = scmp.eq.s32.totalorder %s36, 7
      %p234 = por %p232, %p233
      %p236 = scmp.ne.s32.totalorder %s221, %s235
      %p237 = scmp.eq.s32.totalorder %s36, 0
      %p238 = por %p236, %p237
      %s240 = sadd.s32 %s239, 1
      %p243 = scmp.eq.s32.totalorder %s30, 7
      %p244 = scmp.ne.s32.totalorder %s239, %s241
      %p245 = scmp.eq.s32.totalorder %s30, 0
      %p246 = por %p244, %p245
      %p247 = scmp.ne.s32.totalorder %s239, %s241
      %p248 = scmp.eq.s32.totalorder %s35, 7
      %p249 = por %p247, %p248
      %p250 = scmp.ne.s32.totalorder %s241, %s242
      %p251 = scmp.eq.s32.totalorder %s35, 0
      %p252 = por %p250, %p251
      %p253 = scmp.ne.s32.totalorder %s241, %s242
      %p254 = scmp.eq.s32.totalorder %s36, 7
      %p255 = por %p253, %p254
      %p257 = scmp.ne.s32.totalorder %s242, %s256
      %p258 = scmp.eq.s32.totalorder %s36, 0
      %p259 = por %p257, %p258
      %p260 = scmp.le.s32.totalorder 1, %s30
      %p261 = scmp.lt.s32.totalorder %s30, 9
      %p262 = pnand %p260, %p261
      %p263 = pneg %p262
      // Predicated region
      $region9: #{tpu_custom_call.1} parent=5 // pred_check
        _
      $region10: #{tpu_custom_call.1} parent=5 // pred_check_branch
        %265 = sbr.rel (%p262) target = $region12
      $region11: #{tpu_custom_call.1} parent=5 // pred_region
        %s266 = ssub.s32 %s30, 1
        // Predicated region
        $region13: #{tpu_custom_call.1} parent=11 // pred_check
          %p267 = pneg %p79
        $region14: #{tpu_custom_call.1} parent=11 // pred_check_branch
          %269 = sbr.rel (%p267) target = $region16
        $region15: #{tpu_custom_call.1} parent=11 // pred_region
          _
        $region16: #{tpu_custom_call.1} parent=11 // pred_fallthru
          _
        // Predicated region
        $region17: #{tpu_custom_call.1} parent=11 // pred_check
          %p270 = pneg %p100
        $region18: #{tpu_custom_call.1} parent=11 // pred_check_branch
          %272 = sbr.rel (%p270) target = $region20
        $region19: #{tpu_custom_call.1} parent=11 // pred_region
          %274 = vsyncadd [#allocation6], 0
          %s276 = sshll.u32 %s3, 4
          %s277 = int_to_ptr.hbm [resolvable:$true] %s276
          %s278 = sshll.u32 [#allocation5], 4
          %s279 = int_to_ptr.vmem [resolvable:$true] %s278
          %281 = dma.hbm_to_vmem [thread:$0]  %s277, 16, %s279, [#allocation6]
        $region20: #{tpu_custom_call.1} parent=11 // pred_fallthru
          _
        // Predicated region
        $region21: #{tpu_custom_call.1} parent=11 // pred_check
          %p282 = pneg %p121
        $region22: #{tpu_custom_call.1} parent=11 // pred_check_branch
          %284 = sbr.rel (%p282) target = $region24
        $region23: #{tpu_custom_call.1} parent=11 // pred_region
          _
        $region24: #{tpu_custom_call.1} parent=11 // pred_fallthru
          _
        // Predicated region
        $region25: #{tpu_custom_call.1} parent=11 // pred_check
          %p285 = pneg %p142
        $region26: #{tpu_custom_call.1} parent=11 // pred_check_branch
          %287 = sbr.rel (%p285) target = $region28
        $region27: #{tpu_custom_call.1} parent=11 // pred_region
          _
        $region28: #{tpu_custom_call.1} parent=11 // pred_fallthru
          _
        // Predicated region
        $region29: #{tpu_custom_call.1} parent=11 // pred_check
          %p288 = pneg %p163
        $region30: #{tpu_custom_call.1} parent=11 // pred_check_branch
          %290 = sbr.rel (%p288) target = $region32
        $region31: #{tpu_custom_call.1} parent=11 // pred_region
          _
        $region32: #{tpu_custom_call.1} parent=11 // pred_fallthru
          _
        // Predicated region
        $region33: #{tpu_custom_call.1} parent=11 // pred_check
          %p291 = pneg %p184
        $region34: #{tpu_custom_call.1} parent=11 // pred_check_branch
          %293 = sbr.rel (%p291) target = $region36
        $region35: #{tpu_custom_call.1} parent=11 // pred_region
          _
        $region36: #{tpu_custom_call.1} parent=11 // pred_fallthru
          _
      $region12: #{tpu_custom_call.1} parent=5 // pred_fallthru
        _
      %p294 = scmp.lt.s32.totalorder %s30, 8
      // Predicated region
      $region37: #{tpu_custom_call.1} parent=5 // pred_check
        %p295 = pneg %p294
      $region38: #{tpu_custom_call.1} parent=5 // pred_check_branch
        %297 = sbr.rel (%p295) target = $region40
      $region39: #{tpu_custom_call.1} parent=5 // pred_region
        // Predicated region
        $region41: #{tpu_custom_call.1} parent=39 // pred_check
          %p298 = pneg %p52
        $region42: #{tpu_custom_call.1} parent=39 // pred_check_branch
          %300 = sbr.rel (%p298) target = $region44
        $region43: #{tpu_custom_call.1} parent=39 // pred_region
          %s301 = sld [smem:[#allocation4 + %s30]]
          %p302 = scmp.lt.s32.totalorder %s301, 63
          %s303 = scalar_select %p302, %s301, 63
          %s304 = scalar_lea.vmem %s1, %s303
          %s305 = sld [smem:[#allocation4 + %s30]]
        $region44: #{tpu_custom_call.1} parent=39 // pred_fallthru
          _
      $region40: #{tpu_custom_call.1} parent=5 // pred_fallthru
        _
      %p306 = scmp.le.s32.totalorder 1, %s30
      %p307 = scmp.lt.s32.totalorder %s30, 9
      %p308 = pnand %p306, %p307
      %p309 = pneg %p308
      // Predicated region
      $region45: #{tpu_custom_call.1} parent=5 // pred_check
        _
      $region46: #{tpu_custom_call.1} parent=5 // pred_check_branch
        %311 = sbr.rel (%p308) target = $region48
      $region47: #{tpu_custom_call.1} parent=5 // pred_region
        %s312 = ssub.s32 %s30, 1
        // Predicated region
        $region49: #{tpu_custom_call.1} parent=47 // pred_check
          %p313 = pneg %p100
        $region50: #{tpu_custom_call.1} parent=47 // pred_check_branch
          %315 = sbr.rel (%p313) target = $region52
        $region51: #{tpu_custom_call.1} parent=47 // pred_region
          %317 = dma.done [#allocation6], 16
        $region52: #{tpu_custom_call.1} parent=47 // pred_fallthru
          _
        %s318 = sld [smem:[#allocation4 + %s35]]
        %p319 = scmp.lt.s32.totalorder %s318, 63
        %s320 = scalar_select %p319, %s318, 63
        %s321 = scalar_lea.vmem %s1, %s320
        %p322 = pneg %p58
        %p323 = pneg %p55
        %p324 = pneg %p79
        %p325 = pneg %p76
        %p326 = pneg %p100
        %p327 = pneg %p97
        %p328 = pneg %p121
        %p329 = pneg %p118
        %p330 = pneg %p142
        %p331 = pneg %p139
        %p332 = pneg %p163
        %p333 = pneg %p160
        %p334 = pneg %p184
        %p335 = pneg %p181
        %p336 = pneg %p210
        %p337 = pneg %p207
        %s338 = sand.u32 %s197, 1
        %s339 = scalar_lea.sflag [#allocation7], %s338
        %s340 = sand.u32 %s197, 1
        %s341 = scalar_lea.vmem [#allocation8], %s340
        %p342 = pneg %p231
        %p343 = pneg %p228
        %p344 = pneg %p252
        %p345 = pneg %p249
        %s346 = sld [smem:[#allocation4 + %s35]]
        %p347 = scmp.lt.s32.totalorder %s346, 63
        %s348 = scalar_select %p347, %s346, 63
        %s349 = scalar_lea.vmem %s1, %s348
        %s350 = sld [smem:[#allocation4 + %s35]]
        %p351 = scmp.eq.s32.totalorder %s35, 0
        // Predicated region
        $region53: #{tpu_custom_call.1} parent=47 // pred_check
          %p352 = pneg %p351
        $region54: #{tpu_custom_call.1} parent=47 // pred_check_branch
          %354 = sbr.rel (%p352) target = $region56
        $region55: #{tpu_custom_call.1} parent=47 // pred_region
          %v355 = vld [vmem:[%s4] sm:$0x1]
          %v357 = vperm.slane %v355, 0
          %358 = vrot.lane.b32.xlu0 %v357, 32
          %v359 = vpop.permute.xlu0 %358
          %vm361 = vcmask 516352
          %362 = vst.msk [vmem:[#allocation2] sm:$0x1] %vm361, %v359
          %v363 = vld [vmem:[%s5] sm:$0x1]
          %vm364 = vcmask 253952
          %365 = vst.msk [vmem:[#allocation11] sm:$0x1] %vm364, %v363
        $region56: #{tpu_custom_call.1} parent=47 // pred_fallthru
          _
        %v366 = vld [vmem:[%s349] sm:$0x1]
        %vm367 = vcmask 253952
        %368 = vst.msk [vmem:[#allocation2] sm:$0x1] %vm367, %v366
        %v369 = vld [vmem:[#allocation2] sm:$0x1]
        %v370 = vld [vmem:[%s2] sm:$0xff]
        %v371 = vld [vmem:[%s2 + $0x8] sm:$0xff]
        %v372 = vld [vmem:[%s2 + $0x10] sm:$0xff]
        %v373 = vld [vmem:[%s2 + $0x18] sm:$0xff]
        %v374 = vld [vmem:[%s2 + $0x20] sm:$0xff]
        %v375 = vld [vmem:[%s2 + $0x28] sm:$0xff]
        %v376 = vld [vmem:[%s2 + $0x30] sm:$0xff]
        %v377 = vld [vmem:[%s2 + $0x38] sm:$0xff]
        %v378 = vld [vmem:[#allocation5] sm:$0x1]
        %vm379 = vcmask 523264
        %v381 = vsel %vm379, %v369, 0
        %383 = vmatpush.msra.mxu0 0.0
        %384 = vmatpush.msra.mxu0 0.0
        %385 = vmatpush.msra.mxu0 0.0
        %386 = vmatpush.msra.mxu0 0.0
        %387 = vmatpush.msra.mxu0 0.0
        %388 = vmatpush.msra.mxu0 0.0
        %389 = vmatpush.msra.mxu0 0.0
        %390 = vmatpush.msra.mxu0 0.0
        %391 = vmatpush.msra.mxu0 %v377
        %392 = vmatpush.msra.mxu0 %v376
        %393 = vmatpush.msra.mxu0 %v375
        %394 = vmatpush.msra.mxu0 %v374
        %395 = vmatpush.msra.mxu0 %v373
        %396 = vmatpush.msra.mxu0 %v372
        %397 = vmatpush.msra.mxu0 %v371
        %398 = vmatpush.msra.mxu0 %v370
        %399 = vmatmul.f32.gmra.mxu0 %v381
        %v400 = vpop.f32.mrf.mxu0
        %v401 = vadd.f32 %v378, %v400
        %402 = vdwg.mxu0
        %v403 = vxor.u32 %v401, 2147483648
        %v404 = vmul.f32 %v403, 1.442695
        %v405 = vpow.pop %v404
        %v406 = vadd.f32 %v405, 1.0
        %v407 = vrcp.pop %v406
        %v408 = vmul.f32 %v406, %v407
        %v409 = vsub.f32 1.0, %v408
        %v410 = vmul.f32 %v407, %v409
        %v411 = vadd.f32 %v407, %v410
        %vm412 = vweird.f32 %v406
        %vm413 = vweird.f32 %v407
        %vm414 = vmor %vm412, %vm413
        %v415 = vsel %vm414, %v407, %v411
        %v416 = vand.u32 2147483647, %v406
        %vm417 = vcmp.eq.f32.partialorder %v416, 8.507059e+37
        %v418 = vand.u32 %v406, 2147483648
        %v419 = vor.u32 1.1754944e-38, %v418
        %v420 = vsel %vm417, %v419, %v415
        %v421 = vmul.f32 1.0, %v420
        %v422 = vtanh.pop %v401
        %v423 = vld [vmem:[#allocation11] sm:$0x1]
        %v425 = vperm.slane %v423, 0
        %426 = vrot.lane.b32.xlu0 %v425, 32
        %v427 = vpop.permute.xlu0 %426
        %v429 = vmul.f32 %v421, %v427
        %431 = vrot.lane.b32.xlu0 %v422, 64
        %v432 = vpop.permute.xlu0 %431
        %v434 = vmul.f32 %v421, %v432
        %436 = vrot.lane.b32.xlu0 %v434, 32
        %v437 = vpop.permute.xlu0 %436
        %v439 = vadd.f32 %v429, %v437
        %v440 = vtanh.pop %v439
        %442 = vrot.lane.b32.xlu0 %v440, 64
        %v443 = vpop.permute.xlu0 %442
        %v445 = vmul.f32 %v421, %v443
        %447 = vrot.lane.b32.xlu0 %v439, 96
        %v448 = vpop.permute.xlu0 %447
        %450 = vst.msk [vmem:[#allocation11] sm:$0x1] %vm367, %v448
        %452 = vrot.lane.b32.xlu0 %v445, 32
        %v453 = vpop.permute.xlu0 %452
        %455 = vst.msk [vmem:[#allocation9] sm:$0x1] %vm367, %v453
        %456 = vrot.lane.b32.xlu0 %v445, 64
        %v457 = vpop.permute.xlu0 %456
        %vm459 = vcmask 516352
        %460 = vst.msk [vmem:[#allocation2] sm:$0x1] %vm459, %v457
        %v461 = vld [vmem:[%s6] sm:$0xff]
        %v462 = vld [vmem:[%s6 + $0x8] sm:$0xff]
        %v463 = vld [vmem:[%s6 + $0x10] sm:$0xff]
        %v464 = vld [vmem:[%s6 + $0x18] sm:$0xff]
        %v465 = vld [vmem:[%s7] sm:$0x1]
        %vm466 = vcmask 261120
        %v467 = vsel %vm466, %v453, 0
        %469 = vmatpush.msra.mxu0 0.0
        %470 = vmatpush.msra.mxu0 0.0
        %471 = vmatpush.msra.mxu0 0.0
        %472 = vmatpush.msra.mxu0 0.0
        %473 = vmatpush.msra.mxu0 0.0
        %474 = vmatpush.msra.mxu0 0.0
        %475 = vmatpush.msra.mxu0 0.0
        %476 = vmatpush.msra.mxu0 0.0
        %477 = vmatpush.msra.mxu0 0.0
        %478 = vmatpush.msra.mxu0 0.0
        %479 = vmatpush.msra.mxu0 0.0
        %480 = vmatpush.msra.mxu0 0.0
        %481 = vmatpush.msra.mxu0 %v464
        %482 = vmatpush.msra.mxu0 %v463
        %483 = vmatpush.msra.mxu0 %v462
        %484 = vmatpush.msra.mxu0 %v461
        %485 = vmatmul.f32.gmra.mxu0 %v467
        %v486 = vpop.f32.mrf.mxu0
        %v487 = vadd.f32 %v465, %v486
        %488 = vdwg.mxu0
        %vm489 = vcmask 1040384
        %v490 = vsel %vm489, %v487, -inf
        %491 = vmax.xlane.f32.xlu0 %v490
        %v492 = vpop.xlane.xlu0 %491
        %v493 = vsub.f32 %v487, %v492
        %v494 = vmul.f32 %v493, 1.442695
        %v495 = vpow.pop %v494
        %v496 = vsel %vm489, %v495, 0.0
        %497 = vadd.xlane.f32.xlu0 %v496
        %v498 = vpop.xlane.xlu0 %497
        %v499 = vlog2.pop %v498
        %v500 = vmul.f32 %v499, 0.6931472
        %v501 = vadd.f32 %v500, %v492
        %v502 = vsub.f32 %v487, %v501
        %503 = vst [vmem:[%s341] sm:$0x1] %v502
        %s504 = sand.u32 %s197, 1
        %s505 = scalar_lea.sflag [#allocation7], %s504
        %s506 = sand.u32 %s197, 1
        %s507 = scalar_lea.vmem [#allocation8], %s506
        // Predicated region
        $region57: #{tpu_custom_call.1} parent=47 // pred_check
          %p508 = pneg %p207
        $region58: #{tpu_custom_call.1} parent=47 // pred_check_branch
          %510 = sbr.rel (%p508) target = $region60
        $region59: #{tpu_custom_call.1} parent=47 // pred_region
          %512 = vsyncadd %s505, 0
          %s513 = scalar_lea.hbm %s8, %s35
          %s515 = sshll.u32 %s507, 4
          %s516 = int_to_ptr.vmem [resolvable:$true] %s515
          %s517 = sshll.u32 %s513, 4
          %s518 = int_to_ptr.hbm [resolvable:$true] %s517
          %520 = dma.vmem_to_hbm [thread:$0]  %s516, 16, %s518, %s505
        $region60: #{tpu_custom_call.1} parent=47 // pred_fallthru
          _
        // Predicated region
        $region61: #{tpu_custom_call.1} parent=47 // pred_check
          %p521 = pneg %p228
        $region62: #{tpu_custom_call.1} parent=47 // pred_check_branch
          %523 = sbr.rel (%p521) target = $region64
        $region63: #{tpu_custom_call.1} parent=47 // pred_region
          %525 = vsyncadd [#allocation10], 0
          %s527 = sshll.u32 [#allocation9], 4
          %s528 = int_to_ptr.vmem [resolvable:$true] %s527
          %s529 = sshll.u32 %s9, 4
          %s530 = int_to_ptr.hbm [resolvable:$true] %s529
          %532 = dma.vmem_to_hbm [thread:$0]  %s528, 16, %s530, [#allocation10]
        $region64: #{tpu_custom_call.1} parent=47 // pred_fallthru
          _
        // Predicated region
        $region65: #{tpu_custom_call.1} parent=47 // pred_check
          %p533 = pneg %p249
        $region66: #{tpu_custom_call.1} parent=47 // pred_check_branch
          %535 = sbr.rel (%p533) target = $region68
        $region67: #{tpu_custom_call.1} parent=47 // pred_region
          %537 = vsyncadd [#allocation10], 0
          %s539 = sshll.u32 [#allocation11], 4
          %s540 = int_to_ptr.vmem [resolvable:$true] %s539
          %s541 = sshll.u32 %s10, 4
          %s542 = int_to_ptr.hbm [resolvable:$true] %s541
          %544 = dma.vmem_to_hbm [thread:$0]  %s540, 16, %s542, [#allocation10]
        $region68: #{tpu_custom_call.1} parent=47 // pred_fallthru
          _
        // Predicated region
        $region69: #{tpu_custom_call.1} parent=47 // pred_check
          %p545 = pneg %p228
        $region70: #{tpu_custom_call.1} parent=47 // pred_check_branch
          %547 = sbr.rel (%p545) target = $region72
        $region71: #{tpu_custom_call.1} parent=47 // pred_region
          %549 = dma.done [#allocation10], 16
        $region72: #{tpu_custom_call.1} parent=47 // pred_fallthru
          _
        // Predicated region
        $region73: #{tpu_custom_call.1} parent=47 // pred_check
          %p550 = pneg %p249
        $region74: #{tpu_custom_call.1} parent=47 // pred_check_branch
          %552 = sbr.rel (%p550) target = $region76
        $region75: #{tpu_custom_call.1} parent=47 // pred_region
          %554 = dma.done [#allocation10], 16
        $region76: #{tpu_custom_call.1} parent=47 // pred_fallthru
          _
      $region48: #{tpu_custom_call.1} parent=5 // pred_fallthru
        _
      %p555 = scmp.le.s32.totalorder 2, %s30
      // Predicated region
      $region77: #{tpu_custom_call.1} parent=5 // pred_check
        %p556 = pneg %p555
      $region78: #{tpu_custom_call.1} parent=5 // pred_check_branch
        %558 = sbr.rel (%p556) target = $region80
      $region79: #{tpu_custom_call.1} parent=5 // pred_region
        %s559 = ssub.s32 %s30, 2
        // Predicated region
        $region81: #{tpu_custom_call.1} parent=79 // pred_check
          %p560 = pneg %p213
        $region82: #{tpu_custom_call.1} parent=79 // pred_check_branch
          %562 = sbr.rel (%p560) target = $region84
        $region83: #{tpu_custom_call.1} parent=79 // pred_region
          %s563 = sand.u32 %s198, 1
          %s564 = scalar_lea.sflag [#allocation7], %s563
          %s565 = sand.u32 %s198, 1
          %s566 = scalar_lea.vmem [#allocation8], %s565
          %568 = dma.done %s564, 16
        $region84: #{tpu_custom_call.1} parent=79 // pred_fallthru
          _
      $region80: #{tpu_custom_call.1} parent=5 // pred_fallthru
        _
    $region6: #{tpu_custom_call.1} parent=1 // loop_footer
      %s34 = sadd.s32 1, %s30
    $region7: #{tpu_custom_call.1} parent=1 // loop_footer_branch
      %29 = sbr.rel target = $region3
    $region8: #{tpu_custom_call.1} parent=1 // loop_exit
      _
    %569 = vsyncpa [#allocation6], 1
    %s570 = scalar_lea.sflag [#allocation6], 1
    %571 = vsyncpa %s570, 1
    %572 = vsyncpa [#allocation7], 1
    %s573 = scalar_lea.sflag [#allocation7], 1
    %574 = vsyncpa %s573, 1
    %575 = vsyncpa [#allocation10], 1

</llo_original>
